<compile_context>
chip_gen: v7x
topology: tpu7x:2x2x1
jax: 0.10.0
libtpu: 0.0.40
codegen_flags: <defaults>
</compile_context>

<pallas_src>
import functools

import jax
import jax.numpy as jnp
from jax import lax
from jax.experimental import pallas as pl
from jax.experimental.pallas import tpu as pltpu


def _atrm_kernel(x_ref, *rest, bt, S, D, Dr, R, fused):
    """One grid step == `bt` batch rows, fully resident in VMEM, no Python batch loop."""
    out_ref = rest[-1]
    w_refs = rest[:-1]

    x = x_ref[...]                                   # (bt, S, D) f32
    x2 = x.reshape(bt * S, D)

    # ---- Q / K projections (1/temperature already folded into Wq, bq) ----
    if fused:                                        # lane-aligned split (Dr % 128 == 0)
        wqk_ref, bqk_ref = w_refs
        qk = jnp.dot(x2, wqk_ref[...], preferred_element_type=jnp.float32) + bqk_ref[...]
        q = qk[:, :Dr].reshape(bt, S, Dr)
        k = qk[:, Dr:].reshape(bt, S, Dr)
    else:                                            # two matmuls, no sub-lane vreg slice
        wq_ref, bq_ref, wk_ref, bk_ref = w_refs
        q = (jnp.dot(x2, wq_ref[...], preferred_element_type=jnp.float32)
             + bq_ref[...]).reshape(bt, S, Dr)
        k = (jnp.dot(x2, wk_ref[...], preferred_element_type=jnp.float32)
             + bk_ref[...]).reshape(bt, S, Dr)

    # ---- attention logits, un-normalized softmax ----
    s = jnp.einsum("bqr,bkr->bqk", q, k, preferred_element_type=jnp.float32)   # (bt,S,S)
    s = s - jnp.max(s, axis=-1, keepdims=True)
    e = jnp.exp(s)                                                             # (bt,S,S)
    # mean-over-queries of softmax == invZ-weighted column sum: only bt*S divides,
    # the (S,S)-sized reduction rides the MXU as a matvec.
    inv_z = (1.0 / float(S)) / jnp.sum(e, axis=-1)                             # (bt,S)
    scores = jnp.einsum("bos,bsk->bok", inv_z[:, None, :], e,
                        preferred_element_type=jnp.float32)[:, 0, :]           # (bt,S)

    # ---- batched top-R selection via pairwise rank (ties -> lowest index, as lax.top_k) ----
    sc_cand = scores[:, :, None]                     # candidate key s   (bt,S,1)
    sc_comp = scores[:, None, :]                     # competitor key t  (bt,1,S)
    row_i = lax.broadcasted_iota(jnp.int32, (S, S), 0)     # candidate index s
    col_i = lax.broadcasted_iota(jnp.int32, (S, S), 1)     # competitor index t
    beats = (sc_comp > sc_cand) | ((sc_comp == sc_cand) & (col_i < row_i)[None, :, :])
    rank = jnp.sum(beats.astype(jnp.float32), axis=-1)     # (bt,S) exact small ints
    sel = jnp.where(rank < float(R), 1.0, 0.0)              # (bt,S) 0/1 mask, exactly R ones

    # ---- ascending-index one-hot gather on the MXU ----
    tri = (row_i <= col_i).astype(jnp.float32)               # tri[t, s] = 1 if t <= s
    asc = jnp.dot(sel, tri, preferred_element_type=jnp.float32) - 1.0    # (bt,S) exact ints
    r_iota = lax.broadcasted_iota(jnp.int32, (R, S), 0).astype(jnp.float32)
    onehot = jnp.where((asc[:, None, :] == r_iota[None, :, :]) & (sel[:, None, :] > 0.5),
                       1.0, 0.0)                              # (bt,R,S)
    gathered = jnp.einsum("brs,bsd->brd", onehot, x,
                          preferred_element_type=jnp.float32)  # one (bt,R,D) lane-dense store
    out_ref[...] = gathered.astype(out_ref.dtype)


def adaptive_token_refinement(x, params, num_tokens, *,
                              reduction_ratio=0.2, batch_block=None):
    B, S, D = x.shape
    Dr = params["wq"].shape[1]
    R = int(num_tokens * reduction_ratio)
    assert 1 <= R <= S, (R, S)

    fp = 4

    def vmem_estimate(bt):
        return (2 * bt * S * D * fp            # x (double-buffered)
                + 2 * bt * R * D * fp          # out (double-buffered)
                + 2 * (D * 2 * Dr + 2 * Dr) * fp   # weights (double-buffered)
                + bt * S * 2 * Dr * fp         # q, k
                + 4 * bt * S * S * fp          # s / e / beats temporaries
                + bt * R * S * fp)             # one-hot gather matrix

    if batch_block is None:
        divisors = [d for d in range(1, B + 1) if B % d == 0]
        # Prefer >= 2 grid steps on the "parallel" axis (v7x: 2 TensorCores) and the
        # largest per-step block whose working set fits ~40 MiB (v7x VMEM is 64 MiB).
        cands = [d for d in divisors if d < B] or divisors
        batch_block = cands[0]
        for d in cands:                        # ascending -> keep the largest that fits
            if vmem_estimate(d) <= 40 * 2**20:
                batch_block = d
    assert B % batch_block == 0, (B, batch_block)
    grid = (B // batch_block,)

    # Fold 1/temperature into the query projection (one-time op on the weights).
    inv_temp = 1.0 / params["temperature"].astype(jnp.float32)[0]
    wq = params["wq"].astype(jnp.float32) * inv_temp
    bq = params["bq"].astype(jnp.float32) * inv_temp
    wk = params["wk"].astype(jnp.float32)
    bk = params["bk"].astype(jnp.float32)

    fused = (Dr % 128 == 0)                    # only fuse when the Q|K split is lane-aligned
    if fused:
        weights = (jnp.concatenate([wq, wk], axis=1),
                   jnp.concatenate([bq, bk], axis=1))
        w_specs = [pl.BlockSpec((D, 2 * Dr), lambda i: (0, 0)),
                   pl.BlockSpec((1, 2 * Dr), lambda i: (0, 0))]
    else:
        weights = (wq, bq, wk, bk)
        w_specs = [pl.BlockSpec((D, Dr), lambda i: (0, 0)),
                   pl.BlockSpec((1, Dr), lambda i: (0, 0)),
                   pl.BlockSpec((D, Dr), lambda i: (0, 0)),
                   pl.BlockSpec((1, Dr), lambda i: (0, 0))]

    vmem_limit = int(min(max(vmem_estimate(batch_block) + (4 << 20), 16 << 20), 96 << 20))

    kernel = functools.partial(_atrm_kernel, bt=batch_block, S=S, D=D, Dr=Dr, R=R,
                               fused=fused)

    return pl.pallas_call(
        kernel,
        out_shape=jax.ShapeDtypeStruct((B, R, D), x.dtype),
        grid_spec=pltpu.PrefetchScalarGridSpec(
            num_scalar_prefetch=0,
            grid=grid,
            in_specs=[pl.BlockSpec((batch_block, S, D), lambda i: (i, 0, 0))] + w_specs,
            out_specs=pl.BlockSpec((batch_block, R, D), lambda i: (i, 0, 0)),
        ),
        compiler_params=pltpu.CompilerParams(
            dimension_semantics=("parallel",),
            vmem_limit_bytes=vmem_limit,
        ),
    )(x, *weights)


def reference(x, params, num_tokens, reduction_ratio=0.2):
    """Pure-JAX mirror of the PyTorch forward (high-precision matmuls)."""
    R = int(num_tokens * reduction_ratio)
    hp = lax.Precision.HIGHEST
    q = jnp.dot(x, params["wq"], precision=hp) + params["bq"]
    k = jnp.dot(x, params["wk"], precision=hp) + params["bk"]
    attn = jnp.einsum("bqr,bkr->bqk", q, k, precision=hp) / params["temperature"][0]
    attn = jax.nn.softmax(attn, axis=-1)
    scores = jnp.mean(attn, axis=1)                         # (B, S)
    _, idx = lax.top_k(scores, R)                           # stable ties (lowest index)
    idx = jnp.sort(idx, axis=-1)
    B, S, D = x.shape
    return jnp.take_along_axis(x, jnp.broadcast_to(idx[:, :, None], (B, R, D)), axis=1)


if __name__ == "__main__":
    key = jax.random.PRNGKey(0)
    keys = jax.random.split(key, 6)

    # Small but TPU-friendly shapes: lane-dense feature dim (torch default is 768).
    B, S, D = 2, 16, 128
    Dr = D // 2
    num_tokens = S                # the torch forward's `num_tokens` argument
    reduction_ratio = 0.2         # keeps R = int(16 * 0.2) = 3 tokens
    R = int(num_tokens * reduction_ratio)

    def w(k, shape, fan_in):
        return jax.random.normal(k, shape, jnp.float32) / jnp.sqrt(float(fan_in))

    params = {
        "wq": w(keys[0], (D, Dr), D), "bq": w(keys[1], (1, Dr), D),
        "wk": w(keys[2], (D, Dr), D), "bk": w(keys[3], (1, Dr), D),
        # learnable temperature; chosen so the softmax is unsaturated and the
        # kernel-vs-reference top-k comparison is not decided by sub-ulp ties.
        "temperature": jnp.full((1,), 8.0, jnp.float32),
    }
    x = jax.random.normal(keys[4], (B, S, D), jnp.float32)

    out = jax.block_until_ready(
        adaptive_token_refinement(x, params, num_tokens,
                                  reduction_ratio=reduction_ratio))
    assert out.shape == (B, R, D), out.shape

    ref = reference(x, params, num_tokens, reduction_ratio)
    max_err = float(jnp.max(jnp.abs(out - ref)))
    # A wrong token selection produces O(1) row differences; the one-hot MXU gather of the
    # f32 source rows is exact up to (at worst) one reduced-precision matmul rounding of x,
    # so this tolerance cleanly verifies the selection + gather semantics.
    assert max_err < 2e-2, f"mismatch vs reference, max abs err = {max_err}"

    print("KERNEL_OK")
</pallas_src>

<mosaic_0001>
module attributes {stable_mosaic.version = 11 : i64} {
  func.func @_atrm_kernel(%arg0: i32, %arg1: memref<1x16x128xf32, #tpu.memory_space<vmem>>, %arg2: memref<128x64xf32, #tpu.memory_space<vmem>>, %arg3: memref<1x64xf32, #tpu.memory_space<vmem>>, %arg4: memref<128x64xf32, #tpu.memory_space<vmem>>, %arg5: memref<1x64xf32, #tpu.memory_space<vmem>>, %arg6: memref<1x3x128xf32, #tpu.memory_space<vmem>>) attributes {dimension_semantics = [#tpu.dimension_semantics<parallel>], iteration_bounds = array<i64: 2>, scalar_prefetch = 0 : i64, scratch_operands = 0 : i64, tpu.core_type = #tpu.core_type<tc>, window_params = [{transform_indices = @transform_0, window_bounds = array<i64: 1, 16, 128>}, {pipeline_mode = #tpu.pipeline_mode<synchronous>, transform_indices = @transform_1, window_bounds = array<i64: 128, 64>}, {pipeline_mode = #tpu.pipeline_mode<synchronous>, transform_indices = @transform_2, window_bounds = array<i64: 1, 64>}, {pipeline_mode = #tpu.pipeline_mode<synchronous>, transform_indices = @transform_3, window_bounds = array<i64: 128, 64>}, {pipeline_mode = #tpu.pipeline_mode<synchronous>, transform_indices = @transform_4, window_bounds = array<i64: 1, 64>}, {transform_indices = @transform_5, window_bounds = array<i64: 1, 3, 128>}]} {
    %c0 = arith.constant 0 : index
    %c0_0 = arith.constant 0 : index
    %c0_1 = arith.constant 0 : index
    %0 = vector.load %arg1[%c0, %c0_0, %c0_1] : memref<1x16x128xf32, #tpu.memory_space<vmem>>, vector<1x16x128xf32>
    %1 = vector.shape_cast %0 : vector<1x16x128xf32> to vector<16x128xf32>
    %c0_2 = arith.constant 0 : index
    %c0_3 = arith.constant 0 : index
    %2 = vector.load %arg2[%c0_2, %c0_3] : memref<128x64xf32, #tpu.memory_space<vmem>>, vector<128x64xf32>
    %cst = arith.constant dense<0.000000e+00> : vector<16x64xf32>
    %3 = tpu.matmul %1, %2, %cst {dimension_numbers = #tpu.dot_dimension_numbers<[1], [0], [0], [1], [0, 0, 1, 1], [], []>} : vector<16x128xf32>, vector<128x64xf32>, vector<16x64xf32> -> vector<16x64xf32>
    %c0_4 = arith.constant 0 : index
    %c0_5 = arith.constant 0 : index
    %4 = vector.load %arg3[%c0_4, %c0_5] : memref<1x64xf32, #tpu.memory_space<vmem>>, vector<1x64xf32>
    %5 = vector.broadcast %4 : vector<1x64xf32> to vector<16x64xf32>
    %6 = arith.addf %3, %5 : vector<16x64xf32>
    %7 = vector.shape_cast %6 : vector<16x64xf32> to vector<1x16x64xf32>
    %c0_6 = arith.constant 0 : index
    %c0_7 = arith.constant 0 : index
    %8 = vector.load %arg4[%c0_6, %c0_7] : memref<128x64xf32, #tpu.memory_space<vmem>>, vector<128x64xf32>
    %cst_8 = arith.constant dense<0.000000e+00> : vector<16x64xf32>
    %9 = tpu.matmul %1, %8, %cst_8 {dimension_numbers = #tpu.dot_dimension_numbers<[1], [0], [0], [1], [0, 0, 1, 1], [], []>} : vector<16x128xf32>, vector<128x64xf32>, vector<16x64xf32> -> vector<16x64xf32>
    %c0_9 = arith.constant 0 : index
    %c0_10 = arith.constant 0 : index
    %10 = vector.load %arg5[%c0_9, %c0_10] : memref<1x64xf32, #tpu.memory_space<vmem>>, vector<1x64xf32>
    %11 = vector.broadcast %10 : vector<1x64xf32> to vector<16x64xf32>
    %12 = arith.addf %9, %11 : vector<16x64xf32>
    %13 = vector.shape_cast %12 : vector<16x64xf32> to vector<1x16x64xf32>
    "tpu.trace_start"() <{level = 10 : i32, message = "bqr,bkr->bqk"}> : () -> ()
    %cst_11 = arith.constant dense<0.000000e+00> : vector<1x16x16xf32>
    %14 = tpu.matmul %7, %13, %cst_11 {dimension_numbers = #tpu.dot_dimension_numbers<[2], [2], [1], [1], [0, 0, 0, 1, 1, 1], [0], [0]>} : vector<1x16x64xf32>, vector<1x16x64xf32>, vector<1x16x16xf32> -> vector<1x16x16xf32>
    "tpu.trace_stop"() : () -> ()
    %cst_12 = arith.constant dense<0xFF800000> : vector<1x16xf32>
    %15 = vector.multi_reduction <maximumf>, %14, %cst_12 [2] : vector<1x16x16xf32> to vector<1x16xf32>
    %16 = vector.shape_cast %15 : vector<1x16xf32> to vector<1x16x1xf32>
    %17 = vector.broadcast %16 : vector<1x16x1xf32> to vector<1x16x16xf32>
    %18 = arith.subf %14, %17 : vector<1x16x16xf32>
    %19 = math.exp %18 : vector<1x16x16xf32>
    %cst_13 = arith.constant dense<0.000000e+00> : vector<1x16xf32>
    %20 = vector.multi_reduction <add>, %19, %cst_13 [2] : vector<1x16x16xf32> to vector<1x16xf32>
    %cst_14 = arith.constant 6.250000e-02 : f32
    %21 = vector.broadcast %cst_14 : f32 to vector<1x16xf32>
    %22 = arith.divf %21, %20 : vector<1x16xf32>
    %23 = vector.shape_cast %22 : vector<1x16xf32> to vector<1x1x16xf32>
    "tpu.trace_start"() <{level = 10 : i32, message = "bos,bsk->bok"}> : () -> ()
    %cst_15 = arith.constant dense<0.000000e+00> : vector<1x1x16xf32>
    %24 = tpu.matmul %23, %19, %cst_15 {dimension_numbers = #tpu.dot_dimension_numbers<[2], [1], [1], [2], [0, 0, 0, 1, 1, 2], [0], [0]>} : vector<1x1x16xf32>, vector<1x16x16xf32>, vector<1x1x16xf32> -> vector<1x1x16xf32>
    "tpu.trace_stop"() : () -> ()
    %25 = vector.shape_cast %24 : vector<1x1x16xf32> to vector<1x16xf32>
    %26 = vector.shape_cast %25 : vector<1x16xf32> to vector<1x16x1xf32>
    %27 = vector.shape_cast %25 : vector<1x16xf32> to vector<1x1x16xf32>
    %28 = tpu.iota {dimensions = array<i32: 0>} : vector<16x16xi32>
    %29 = tpu.iota {dimensions = array<i32: 1>} : vector<16x16xi32>
    %30 = vector.broadcast %27 : vector<1x1x16xf32> to vector<1x16x16xf32>
    %31 = vector.broadcast %26 : vector<1x16x1xf32> to vector<1x16x16xf32>
    %32 = arith.cmpf ogt, %30, %31 : vector<1x16x16xf32>
    %33 = vector.broadcast %27 : vector<1x1x16xf32> to vector<1x16x16xf32>
    %34 = vector.broadcast %26 : vector<1x16x1xf32> to vector<1x16x16xf32>
    %35 = arith.cmpf oeq, %33, %34 : vector<1x16x16xf32>
    %36 = arith.cmpi slt, %29, %28 : vector<16x16xi32>
    %37 = vector.shape_cast %36 : vector<16x16xi1> to vector<1x16x16xi1>
    %38 = arith.andi %35, %37 : vector<1x16x16xi1>
    %39 = arith.ori %32, %38 : vector<1x16x16xi1>
    %40 = arith.extui %39 : vector<1x16x16xi1> to vector<1x16x16xi32>
    %41 = arith.sitofp %40 : vector<1x16x16xi32> to vector<1x16x16xf32>
    %cst_16 = arith.constant dense<0.000000e+00> : vector<1x16xf32>
    %42 = vector.multi_reduction <add>, %41, %cst_16 [2] : vector<1x16x16xf32> to vector<1x16xf32>
    %cst_17 = arith.constant 3.000000e+00 : f32
    %43 = vector.broadcast %cst_17 : f32 to vector<1x16xf32>
    %44 = arith.cmpf olt, %42, %43 : vector<1x16xf32>
    %cst_18 = arith.constant 1.000000e+00 : f32
    %cst_19 = arith.constant 0.000000e+00 : f32
    %45 = vector.broadcast %cst_18 : f32 to vector<1x16xf32>
    %46 = vector.broadcast %cst_19 : f32 to vector<1x16xf32>
    %47 = arith.select %44, %45, %46 : vector<1x16xi1>, vector<1x16xf32>
    %48 = arith.cmpi sle, %28, %29 : vector<16x16xi32>
    %49 = arith.extui %48 : vector<16x16xi1> to vector<16x16xi32>
    %50 = arith.sitofp %49 : vector<16x16xi32> to vector<16x16xf32>
    %cst_20 = arith.constant dense<0.000000e+00> : vector<1x16xf32>
    %51 = tpu.matmul %47, %50, %cst_20 {dimension_numbers = #tpu.dot_dimension_numbers<[1], [0], [0], [1], [0, 0, 1, 1], [], []>} : vector<1x16xf32>, vector<16x16xf32>, vector<1x16xf32> -> vector<1x16xf32>
    %cst_21 = arith.constant 1.000000e+00 : f32
    %52 = vector.broadcast %cst_21 : f32 to vector<1x16xf32>
    %53 = arith.subf %51, %52 : vector<1x16xf32>
    %54 = tpu.iota {dimensions = array<i32: 0>} : vector<3x16xi32>
    %55 = arith.sitofp %54 : vector<3x16xi32> to vector<3x16xf32>
    %56 = vector.shape_cast %53 : vector<1x16xf32> to vector<1x1x16xf32>
    %57 = vector.shape_cast %55 : vector<3x16xf32> to vector<1x3x16xf32>
    %58 = vector.broadcast %56 : vector<1x1x16xf32> to vector<1x3x16xf32>
    %59 = arith.cmpf oeq, %58, %57 : vector<1x3x16xf32>
    %60 = vector.shape_cast %47 : vector<1x16xf32> to vector<1x1x16xf32>
    %cst_22 = arith.constant 5.000000e-01 : f32
    %61 = vector.broadcast %cst_22 : f32 to vector<1x1x16xf32>
    %62 = arith.cmpf ogt, %60, %61 : vector<1x1x16xf32>
    %63 = vector.broadcast %62 : vector<1x1x16xi1> to vector<1x3x16xi1>
    %64 = arith.andi %59, %63 : vector<1x3x16xi1>
    %cst_23 = arith.constant 1.000000e+00 : f32
    %cst_24 = arith.constant 0.000000e+00 : f32
    %65 = vector.broadcast %cst_23 : f32 to vector<1x3x16xf32>
    %66 = vector.broadcast %cst_24 : f32 to vector<1x3x16xf32>
    %67 = arith.select %64, %65, %66 : vector<1x3x16xi1>, vector<1x3x16xf32>
    "tpu.trace_start"() <{level = 10 : i32, message = "brs,bsd->brd"}> : () -> ()
    %cst_25 = arith.constant dense<0.000000e+00> : vector<1x3x128xf32>
    %68 = tpu.matmul %67, %0, %cst_25 {dimension_numbers = #tpu.dot_dimension_numbers<[2], [1], [1], [2], [0, 0, 0, 1, 1, 2], [0], [0]>} : vector<1x3x16xf32>, vector<1x16x128xf32>, vector<1x3x128xf32> -> vector<1x3x128xf32>
    "tpu.trace_stop"() : () -> ()
    %c0_26 = arith.constant 0 : index
    %c0_27 = arith.constant 0 : index
    %c0_28 = arith.constant 0 : index
    %69 = vector.load %arg6[%c0_26, %c0_27, %c0_28] : memref<1x3x128xf32, #tpu.memory_space<vmem>>, vector<1x3x128xf32>
    tpu.vector_store %arg6[%c0_26, %c0_27, %c0_28], %68 {strides = array<i32>} : memref<1x3x128xf32, #tpu.memory_space<vmem>>, vector<1x3x128xf32>,
    return
  }
  func.func @transform_0(%arg0: i32) -> (i32, i32, i32) {
    %c0_i32 = arith.constant 0 : i32
    %c0_i32_0 = arith.constant 0 : i32
    %c0_i32_1 = arith.constant 0 : i32
    return %arg0, %c0_i32, %c0_i32_0 : i32, i32, i32
  }
  func.func @transform_1(%arg0: i32) -> (i32, i32) {
    %c0_i32 = arith.constant 0 : i32
    %c0_i32_0 = arith.constant 0 : i32
    %c0_i32_1 = arith.constant 0 : i32
    return %c0_i32, %c0_i32_0 : i32, i32
  }
  func.func @transform_2(%arg0: i32) -> (i32, i32) {
    %c0_i32 = arith.constant 0 : i32
    %c0_i32_0 = arith.constant 0 : i32
    %c0_i32_1 = arith.constant 0 : i32
    return %c0_i32, %c0_i32_0 : i32, i32
  }
  func.func @transform_3(%arg0: i32) -> (i32, i32) {
    %c0_i32 = arith.constant 0 : i32
    %c0_i32_0 = arith.constant 0 : i32
    %c0_i32_1 = arith.constant 0 : i32
    return %c0_i32, %c0_i32_0 : i32, i32
  }
  func.func @transform_4(%arg0: i32) -> (i32, i32) {
    %c0_i32 = arith.constant 0 : i32
    %c0_i32_0 = arith.constant 0 : i32
    %c0_i32_1 = arith.constant 0 : i32
    return %c0_i32, %c0_i32_0 : i32, i32
  }
  func.func @transform_5(%arg0: i32) -> (i32, i32, i32) {
    %c0_i32 = arith.constant 0 : i32
    %c0_i32_0 = arith.constant 0 : i32
    %c0_i32_1 = arith.constant 0 : i32
    return %arg0, %c0_i32, %c0_i32_0 : i32, i32, i32
  }
}

</mosaic_0001>

<llo_original>
// kernel: tpu_custom_call.1
$region0: #{tpu_custom_call.1}
  #allocation0 [shape = 'u32[]', space=smem, size = 0x4, offset = 0x4, fixed_abs, tag = 'smem constant byte address 0x4 - core index']
  #allocation1 [shape = 'u32[144,128]{1,0:T(1,128)}', space=vmem, size = 0x12000, scoped, tag = 'internal scratch']
  %s0 = inlined_call_operand.vmem [shape: f32[2,16,128], index: 0, kind: input, shape index: {}]
  %s1 = inlined_call_operand.vmem [shape: f32[128,64], index: 1, kind: input, shape index: {}]
  %s2 = inlined_call_operand.vmem [shape: f32[1,64], index: 2, kind: input, shape index: {}]
  %s3 = inlined_call_operand.vmem [shape: f32[128,64], index: 3, kind: input, shape index: {}]
  %s4 = inlined_call_operand.vmem [shape: f32[1,64], index: 4, kind: input, shape index: {}]
  %s5 = inlined_call_operand.vmem [shape: f32[2,3,128], index: 5, kind: output, shape index: {}]
  %s6 = sld [smem:[#allocation0]]
  $region53: #{tpu_custom_call.1} parent=0
    _
  %s8 = ssub.s32 1, %s6
  %s9 = scalar_select 0, %s8, %s6
  loop: start=0, step=1, limit=4
  $region2: #{tpu_custom_call.1} parent=0 // loop_pre_header
    _
  $region3: #{tpu_custom_call.1} parent=0 // loop_header
    %s11 = sphi 0, %s15
    %p12 = scmp.ge.s32.totalorder %s11, 4
    %s21 = sphi 0, %s23
    %s24 = sphi 0, %s21
    %s25 = sphi 0, %s24
    %s41 = sphi 0, %s25
    %s45 = sphi 0, %s45
    %s47 = sphi 0, %s45
    %s48 = sphi 0, %s47
    %s62 = sphi 0, %s48
    %s66 = sphi 0, %s66
    %s68 = sphi 0, %s66
    %s69 = sphi 0, %s68
    %s83 = sphi 0, %s69
    %s87 = sphi 0, %s87
    %s89 = sphi 0, %s87
    %s90 = sphi 0, %s89
    %s104 = sphi 0, %s90
    %s108 = sphi 0, %s108
    %s110 = sphi 0, %s108
    %s111 = sphi 0, %s110
    %s125 = sphi 0, %s111
    %s131 = sphi 0, %s133
    %s134 = sphi 0, %s131
    %s135 = sphi 0, %s134
    %s151 = sphi 0, %s135
  $region4: #{tpu_custom_call.1} parent=0 // loop_header_branch
    %14 = sbr.rel (%p12) target = $region8
  $region5: #{tpu_custom_call.1} parent=0 // loop_body
    %s16 = ssub.s32 %s11, 1
    %s17 = ssub.s32 %s11, 2
    %s18 = sadd.s32 %s11, 1
    %s19 = ssub.s32 %s11, %s18
    %p20 = scmp.eq.s32.totalorder %s19, 0
    %s22 = sadd.s32 %s21, 1
    %s23 = scalar_select %p20, %s21, %s22
    %p26 = pneg %p20
    %p27 = scmp.eq.s32.totalorder %s11, 1
    %p28 = por %p26, %p27
    %p29 = scmp.ne.s32.totalorder %s21, %s24
    %p30 = scmp.eq.s32.totalorder %s11, 0
    %p31 = por %p29, %p30
    %p32 = scmp.ne.s32.totalorder %s21, %s24
    %p33 = scmp.eq.s32.totalorder %s16, 1
    %p34 = por %p32, %p33
    %p35 = scmp.ne.s32.totalorder %s24, %s25
    %p36 = scmp.eq.s32.totalorder %s16, 0
    %p37 = por %p35, %p36
    %p38 = scmp.ne.s32.totalorder %s24, %s25
    %p39 = scmp.eq.s32.totalorder %s17, 1
    %p40 = por %p38, %p39
    %p42 = scmp.ne.s32.totalorder %s25, %s41
    %p43 = scmp.eq.s32.totalorder %s17, 0
    %p44 = por %p42, %p43
    %s46 = sadd.s32 %s45, 1
    %p49 = scmp.eq.s32.totalorder %s11, 1
    %p50 = scmp.ne.s32.totalorder %s45, %s47
    %p51 = scmp.eq.s32.totalorder %s11, 0
    %p52 = por %p50, %p51
    %p53 = scmp.ne.s32.totalorder %s45, %s47
    %p54 = scmp.eq.s32.totalorder %s16, 1
    %p55 = por %p53, %p54
    %p56 = scmp.ne.s32.totalorder %s47, %s48
    %p57 = scmp.eq.s32.totalorder %s16, 0
    %p58 = por %p56, %p57
    %p59 = scmp.ne.s32.totalorder %s47, %s48
    %p60 = scmp.eq.s32.totalorder %s17, 1
    %p61 = por %p59, %p60
    %p63 = scmp.ne.s32.totalorder %s48, %s62
    %p64 = scmp.eq.s32.totalorder %s17, 0
    %p65 = por %p63, %p64
    %s67 = sadd.s32 %s66, 1
    %p70 = scmp.eq.s32.totalorder %s11, 1
    %p71 = scmp.ne.s32.totalorder %s66, %s68
    %p72 = scmp.eq.s32.totalorder %s11, 0
    %p73 = por %p71, %p72
    %p74 = scmp.ne.s32.totalorder %s66, %s68
    %p75 = scmp.eq.s32.totalorder %s16, 1
    %p76 = por %p74, %p75
    %p77 = scmp.ne.s32.totalorder %s68, %s69
    %p78 = scmp.eq.s32.totalorder %s16, 0
    %p79 = por %p77, %p78
    %p80 = scmp.ne.s32.totalorder %s68, %s69
    %p81 = scmp.eq.s32.totalorder %s17, 1
    %p82 = por %p80, %p81
    %p84 = scmp.ne.s32.totalorder %s69, %s83
    %p85 = scmp.eq.s32.totalorder %s17, 0
    %p86 = por %p84, %p85
    %s88 = sadd.s32 %s87, 1
    %p91 = scmp.eq.s32.totalorder %s11, 1
    %p92 = scmp.ne.s32.totalorder %s87, %s89
    %p93 = scmp.eq.s32.totalorder %s11, 0
    %p94 = por %p92, %p93
    %p95 = scmp.ne.s32.totalorder %s87, %s89
    %p96 = scmp.eq.s32.totalorder %s16, 1
    %p97 = por %p95, %p96
    %p98 = scmp.ne.s32.totalorder %s89, %s90
    %p99 = scmp.eq.s32.totalorder %s16, 0
    %p100 = por %p98, %p99
    %p101 = scmp.ne.s32.totalorder %s89, %s90
    %p102 = scmp.eq.s32.totalorder %s17, 1
    %p103 = por %p101, %p102
    %p105 = scmp.ne.s32.totalorder %s90, %s104
    %p106 = scmp.eq.s32.totalorder %s17, 0
    %p107 = por %p105, %p106
    %s109 = sadd.s32 %s108, 1
    %p112 = scmp.eq.s32.totalorder %s11, 1
    %p113 = scmp.ne.s32.totalorder %s108, %s110
    %p114 = scmp.eq.s32.totalorder %s11, 0
    %p115 = por %p113, %p114
    %p116 = scmp.ne.s32.totalorder %s108, %s110
    %p117 = scmp.eq.s32.totalorder %s16, 1
    %p118 = por %p116, %p117
    %p119 = scmp.ne.s32.totalorder %s110, %s111
    %p120 = scmp.eq.s32.totalorder %s16, 0
    %p121 = por %p119, %p120
    %p122 = scmp.ne.s32.totalorder %s110, %s111
    %p123 = scmp.eq.s32.totalorder %s17, 1
    %p124 = por %p122, %p123
    %p126 = scmp.ne.s32.totalorder %s111, %s125
    %p127 = scmp.eq.s32.totalorder %s17, 0
    %p128 = por %p126, %p127
    %s129 = ssub.s32 %s11, %s18
    %p130 = scmp.eq.s32.totalorder %s129, 0
    %s132 = sadd.s32 %s131, 1
    %s133 = scalar_select %p130, %s131, %s132
    %p136 = pneg %p130
    %p137 = scmp.eq.s32.totalorder %s11, 1
    %p138 = por %p136, %p137
    %p139 = scmp.ne.s32.totalorder %s131, %s134
    %p140 = scmp.eq.s32.totalorder %s11, 0
    %p141 = por %p139, %p140
    %p142 = scmp.ne.s32.totalorder %s131, %s134
    %p143 = scmp.eq.s32.totalorder %s16, 1
    %p144 = por %p142, %p143
    %p145 = scmp.ne.s32.totalorder %s134, %s135
    %p146 = scmp.eq.s32.totalorder %s16, 0
    %p147 = por %p145, %p146
    %p148 = scmp.ne.s32.totalorder %s134, %s135
    %p149 = scmp.eq.s32.totalorder %s17, 1
    %p150 = por %p148, %p149
    %p152 = scmp.ne.s32.totalorder %s135, %s151
    %p153 = scmp.eq.s32.totalorder %s17, 0
    %p154 = por %p152, %p153
    %p155 = scmp.le.s32.totalorder 1, %s11
    %p156 = scmp.lt.s32.totalorder %s11, 3
    %p157 = pnand %p155, %p156
    %p158 = pneg %p157
    // Predicated region
    $region9: #{tpu_custom_call.1} parent=5 // pred_check
      _
    $region10: #{tpu_custom_call.1} parent=5 // pred_check_branch
      %160 = sbr.rel (%p157) target = $region12
    $region11: #{tpu_custom_call.1} parent=5 // pred_region
      %s161 = ssub.s32 %s11, 1
      // Predicated region
      $region13: #{tpu_custom_call.1} parent=11 // pred_check
        %p162 = pneg %p58
      $region14: #{tpu_custom_call.1} parent=11 // pred_check_branch
        %164 = sbr.rel (%p162) target = $region16
      $region15: #{tpu_custom_call.1} parent=11 // pred_region
        _
      $region16: #{tpu_custom_call.1} parent=11 // pred_fallthru
        _
      // Predicated region
      $region17: #{tpu_custom_call.1} parent=11 // pred_check
        %p165 = pneg %p79
      $region18: #{tpu_custom_call.1} parent=11 // pred_check_branch
        %167 = sbr.rel (%p165) target = $region20
      $region19: #{tpu_custom_call.1} parent=11 // pred_region
        _
      $region20: #{tpu_custom_call.1} parent=11 // pred_fallthru
        _
      // Predicated region
      $region21: #{tpu_custom_call.1} parent=11 // pred_check
        %p168 = pneg %p100
      $region22: #{tpu_custom_call.1} parent=11 // pred_check_branch
        %170 = sbr.rel (%p168) target = $region24
      $region23: #{tpu_custom_call.1} parent=11 // pred_region
        _
      $region24: #{tpu_custom_call.1} parent=11 // pred_fallthru
        _
      // Predicated region
      $region25: #{tpu_custom_call.1} parent=11 // pred_check
        %p171 = pneg %p121
      $region26: #{tpu_custom_call.1} parent=11 // pred_check_branch
        %173 = sbr.rel (%p171) target = $region28
      $region27: #{tpu_custom_call.1} parent=11 // pred_region
        _
      $region28: #{tpu_custom_call.1} parent=11 // pred_fallthru
        _
    $region12: #{tpu_custom_call.1} parent=5 // pred_fallthru
      _
    %p174 = scmp.lt.s32.totalorder %s11, 2
    // Predicated region
    $region29: #{tpu_custom_call.1} parent=5 // pred_check
      %p175 = pneg %p174
    $region30: #{tpu_custom_call.1} parent=5 // pred_check_branch
      %177 = sbr.rel (%p175) target = $region32
    $region31: #{tpu_custom_call.1} parent=5 // pred_region
      // Predicated region
      $region33: #{tpu_custom_call.1} parent=31 // pred_check
        %p178 = pneg %p31
      $region34: #{tpu_custom_call.1} parent=31 // pred_check_branch
        %180 = sbr.rel (%p178) target = $region36
      $region35: #{tpu_custom_call.1} parent=31 // pred_region
        %p181 = scmp.lt.s32.totalorder %s11, 1
        %s182 = scalar_select %p181, %s11, 1
        %s183 = smul.addr %s182, 2
        %s184 = smul.addr %s183, 8
        %s185 = scalar_lea.vmem %s0, %s184
      $region36: #{tpu_custom_call.1} parent=31 // pred_fallthru
        _
    $region32: #{tpu_custom_call.1} parent=5 // pred_fallthru
      _
    %p186 = scmp.le.s32.totalorder 1, %s11
    %p187 = scmp.lt.s32.totalorder %s11, 3
    %p188 = pnand %p186, %p187
    %p189 = pneg %p188
    // Predicated region
    $region37: #{tpu_custom_call.1} parent=5 // pred_check
      _
    $region38: #{tpu_custom_call.1} parent=5 // pred_check_branch
      %191 = sbr.rel (%p188) target = $region40
    $region39: #{tpu_custom_call.1} parent=5 // pred_region
      %s192 = ssub.s32 %s11, 1
      %p193 = scmp.lt.s32.totalorder %s16, 1
      %s194 = scalar_select %p193, %s16, 1
      %s195 = smul.addr %s194, 2
      %s196 = smul.addr %s195, 8
      %s197 = scalar_lea.vmem %s0, %s196
      %p198 = pneg %p37
      %p199 = pneg %p34
      %p200 = pneg %p58
      %p201 = pneg %p55
      %p202 = pneg %p79
      %p203 = pneg %p76
      %p204 = pneg %p100
      %p205 = pneg %p97
      %p206 = pneg %p121
      %p207 = pneg %p118
      %p208 = pneg %p147
      %p209 = pneg %p144
      %p210 = scmp.lt.s32.totalorder %s16, 1
      %s211 = scalar_select %p210, %s16, 1
      %s212 = smul.addr %s211, 4
      %s213 = scalar_lea.vmem %s5, %s212
      %p214 = scmp.lt.s32.totalorder %s16, 1
      %s215 = scalar_select %p214, %s16, 1
      %s216 = smul.addr %s215, 2
      %s217 = smul.addr %s216, 8
      %s218 = scalar_lea.vmem %s0, %s217
      %p219 = scmp.lt.s32.totalorder %s16, 1
      %s220 = scalar_select %p219, %s16, 1
      %s221 = smul.addr %s220, 4
      %s222 = scalar_lea.vmem %s5, %s221
      %v223 = vld [vmem:[%s218] sm:$0xff]
      %v224 = vld [vmem:[%s218 + $0x8] sm:$0xff]
      %v225 = vld [vmem:[%s1] sm:$0xff]
      %v226 = vld [vmem:[%s1 + $0x8] sm:$0xff]
      %v227 = vld [vmem:[%s1 + $0x10] sm:$0xff]
      %v228 = vld [vmem:[%s1 + $0x18] sm:$0xff]
      %v229 = vld [vmem:[%s1 + $0x20] sm:$0xff]
      %v230 = vld [vmem:[%s1 + $0x28] sm:$0xff]
      %v231 = vld [vmem:[%s1 + $0x30] sm:$0xff]
      %v232 = vld [vmem:[%s1 + $0x38] sm:$0xff]
      %v233 = vld [vmem:[%s1 + $0x40] sm:$0xff]
      %v234 = vld [vmem:[%s1 + $0x48] sm:$0xff]
      %v235 = vld [vmem:[%s1 + $0x50] sm:$0xff]
      %v236 = vld [vmem:[%s1 + $0x58] sm:$0xff]
      %v237 = vld [vmem:[%s1 + $0x60] sm:$0xff]
      %v238 = vld [vmem:[%s1 + $0x68] sm:$0xff]
      %v239 = vld [vmem:[%s1 + $0x70] sm:$0xff]
      %v240 = vld [vmem:[%s1 + $0x78] sm:$0xff]
      %v241 = vld [vmem:[%s2] sm:$0x1]
      %v243 = vlaneseq
      %v244 = vshrl.u32 %v243, 7
      %v245 = vsub.s32 0, %v244
      %v246 = vrot.slane %v241, %v245
      %248 = vmatprep.subr.mxu0 0.0
      %249 = vmatpush1.msra.mxu0 %v225
      %250 = vmatprep.subr.mxu0 0.0
      %251 = vmatpush1.msra.mxu0 %v226
      %252 = vmatprep.subr.mxu0 0.0
      %253 = vmatpush1.msra.mxu0 %v227
      %254 = vmatprep.subr.mxu0 0.0
      %255 = vmatpush1.msra.mxu0 %v228
      %256 = vmatprep.subr.mxu0 0.0
      %257 = vmatpush1.msra.mxu0 %v229
      %258 = vmatprep.subr.mxu0 0.0
      %259 = vmatpush1.msra.mxu0 %v230
      %260 = vmatprep.subr.mxu0 0.0
      %261 = vmatpush1.msra.mxu0 %v231
      %262 = vmatprep.subr.mxu0 0.0
      %263 = vmatpush1.msra.mxu0 %v232
      %264 = vmatprep.subr.mxu0 0.0
      %265 = vmatpush1.msra.mxu0 %v233
      %266 = vmatprep.subr.mxu0 0.0
      %267 = vmatpush1.msra.mxu0 %v234
      %268 = vmatprep.subr.mxu0 0.0
      %269 = vmatpush1.msra.mxu0 %v235
      %270 = vmatprep.subr.mxu0 0.0
      %271 = vmatpush1.msra.mxu0 %v236
      %272 = vmatprep.subr.mxu0 0.0
      %273 = vmatpush1.msra.mxu0 %v237
      %274 = vmatprep.subr.mxu0 0.0
      %275 = vmatpush1.msra.mxu0 %v238
      %276 = vmatprep.subr.mxu0 0.0
      %277 = vmatpush1.msra.mxu0 %v239
      %278 = vmatprep.subr.mxu0 0.0
      %279 = vmatpush1.msra.mxu0 %v240
      %280 = vmatprep.subr.mxu0 0.0
      %281 = vmatpush1.msra.mxu0 0.0
      %282 = vmatprep.subr.mxu0 0.0
      %283 = vmatpush1.msra.mxu0 0.0
      %284 = vmatprep.subr.mxu0 0.0
      %285 = vmatpush1.msra.mxu0 0.0
      %286 = vmatprep.subr.mxu0 0.0
      %287 = vmatpush1.msra.mxu0 0.0
      %288 = vmatprep.subr.mxu0 0.0
      %289 = vmatpush1.msra.mxu0 0.0
      %290 = vmatprep.subr.mxu0 0.0
      %291 = vmatpush1.msra.mxu0 0.0
      %292 = vmatprep.subr.mxu0 0.0
      %293 = vmatpush1.msra.mxu0 0.0
      %294 = vmatprep.subr.mxu0 0.0
      %295 = vmatpush1.msra.mxu0 0.0
      %296 = vmatprep.subr.mxu0 0.0
      %297 = vmatpush1.msra.mxu0 0.0
      %298 = vmatprep.subr.mxu0 0.0
      %299 = vmatpush1.msra.mxu0 0.0
      %300 = vmatprep.subr.mxu0 0.0
      %301 = vmatpush1.msra.mxu0 0.0
      %302 = vmatprep.subr.mxu0 0.0
      %303 = vmatpush1.msra.mxu0 0.0
      %304 = vmatprep.subr.mxu0 0.0
      %305 = vmatpush1.msra.mxu0 0.0
      %306 = vmatprep.subr.mxu0 0.0
      %307 = vmatpush1.msra.mxu0 0.0
      %308 = vmatprep.subr.mxu0 0.0
      %309 = vmatpush1.msra.mxu0 0.0
      %310 = vmatprep.subr.mxu0 0.0
      %311 = vmatpush1.msra.mxu0 0.0
      %312 = vmatprep.mubr.f32.mxu0 0.0
      %313 = vmatmul.mubr.f32.gmra.mrb[0].mxu0 %v223
      %v314 = vpop.f32.mrb[0].mxu0
      %v315 = vadd.f32 %v246, %v314
      %v316 = vpop.f32.mrb[0].mxu0
      %317 = vmatprep.mubr.f32.mxu0 0.0
      %318 = vmatmul.mubr.f32.gmra.mrb[0].mxu0 %v224
      %v319 = vpop.f32.mrb[0].mxu0
      %v320 = vadd.f32 %v246, %v319
      %v321 = vpop.f32.mrb[0].mxu0
      %322 = vdwg.mxu0
      %v323 = vld [vmem:[%s3] sm:$0xff]
      %v324 = vld [vmem:[%s3 + $0x8] sm:$0xff]
      %v325 = vld [vmem:[%s3 + $0x10] sm:$0xff]
      %v326 = vld [vmem:[%s3 + $0x18] sm:$0xff]
      %v327 = vld [vmem:[%s3 + $0x20] sm:$0xff]
      %v328 = vld [vmem:[%s3 + $0x28] sm:$0xff]
      %v329 = vld [vmem:[%s3 + $0x30] sm:$0xff]
      %v330 = vld [vmem:[%s3 + $0x38] sm:$0xff]
      %v331 = vld [vmem:[%s3 + $0x40] sm:$0xff]
      %v332 = vld [vmem:[%s3 + $0x48] sm:$0xff]
      %v333 = vld [vmem:[%s3 + $0x50] sm:$0xff]
      %v334 = vld [vmem:[%s3 + $0x58] sm:$0xff]
      %v335 = vld [vmem:[%s3 + $0x60] sm:$0xff]
      %v336 = vld [vmem:[%s3 + $0x68] sm:$0xff]
      %v337 = vld [vmem:[%s3 + $0x70] sm:$0xff]
      %v338 = vld [vmem:[%s3 + $0x78] sm:$0xff]
      %v339 = vld [vmem:[%s4] sm:$0x1]
      %v341 = vlaneseq
      %v342 = vshrl.u32 %v341, 7
      %v343 = vsub.s32 0, %v342
      %v344 = vrot.slane %v339, %v343
      %346 = vmatprep.subr.mxu0 0.0
      %347 = vmatpush1.msra.mxu0 %v323
      %348 = vmatprep.subr.mxu0 0.0
      %349 = vmatpush1.msra.mxu0 %v324
      %350 = vmatprep.subr.mxu0 0.0
      %351 = vmatpush1.msra.mxu0 %v325
      %352 = vmatprep.subr.mxu0 0.0
      %353 = vmatpush1.msra.mxu0 %v326
      %354 = vmatprep.subr.mxu0 0.0
      %355 = vmatpush1.msra.mxu0 %v327
      %356 = vmatprep.subr.mxu0 0.0
      %357 = vmatpush1.msra.mxu0 %v328
      %358 = vmatprep.subr.mxu0 0.0
      %359 = vmatpush1.msra.mxu0 %v329
      %360 = vmatprep.subr.mxu0 0.0
      %361 = vmatpush1.msra.mxu0 %v330
      %362 = vmatprep.subr.mxu0 0.0
      %363 = vmatpush1.msra.mxu0 %v331
      %364 = vmatprep.subr.mxu0 0.0
      %365 = vmatpush1.msra.mxu0 %v332
      %366 = vmatprep.subr.mxu0 0.0
      %367 = vmatpush1.msra.mxu0 %v333
      %368 = vmatprep.subr.mxu0 0.0
      %369 = vmatpush1.msra.mxu0 %v334
      %370 = vmatprep.subr.mxu0 0.0
      %371 = vmatpush1.msra.mxu0 %v335
      %372 = vmatprep.subr.mxu0 0.0
      %373 = vmatpush1.msra.mxu0 %v336
      %374 = vmatprep.subr.mxu0 0.0
      %375 = vmatpush1.msra.mxu0 %v337
      %376 = vmatprep.subr.mxu0 0.0
      %377 = vmatpush1.msra.mxu0 %v338
      %378 = vmatprep.subr.mxu0 0.0
      %379 = vmatpush1.msra.mxu0 0.0
      %380 = vmatprep.subr.mxu0 0.0
      %381 = vmatpush1.msra.mxu0 0.0
      %382 = vmatprep.subr.mxu0 0.0
      %383 = vmatpush1.msra.mxu0 0.0
      %384 = vmatprep.subr.mxu0 0.0
      %385 = vmatpush1.msra.mxu0 0.0
      %386 = vmatprep.subr.mxu0 0.0
      %387 = vmatpush1.msra.mxu0 0.0
      %388 = vmatprep.subr.mxu0 0.0
      %389 = vmatpush1.msra.mxu0 0.0
      %390 = vmatprep.subr.mxu0 0.0
      %391 = vmatpush1.msra.mxu0 0.0
      %392 = vmatprep.subr.mxu0 0.0
      %393 = vmatpush1.msra.mxu0 0.0
      %394 = vmatprep.subr.mxu0 0.0
      %395 = vmatpush1.msra.mxu0 0.0
      %396 = vmatprep.subr.mxu0 0.0
      %397 = vmatpush1.msra.mxu0 0.0
      %398 = vmatprep.subr.mxu0 0.0
      %399 = vmatpush1.msra.mxu0 0.0
      %400 = vmatprep.subr.mxu0 0.0
      %401 = vmatpush1.msra.mxu0 0.0
      %402 = vmatprep.subr.mxu0 0.0
      %403 = vmatpush1.msra.mxu0 0.0
      %404 = vmatprep.subr.mxu0 0.0
      %405 = vmatpush1.msra.mxu0 0.0
      %406 = vmatprep.subr.mxu0 0.0
      %407 = vmatpush1.msra.mxu0 0.0
      %408 = vmatprep.subr.mxu0 0.0
      %409 = vmatpush1.msra.mxu0 0.0
      %410 = vmatprep.mubr.f32.mxu0 0.0
      %411 = vmatmul.mubr.f32.gmra.mrb[0].mxu0 %v223
      %v412 = vpop.f32.mrb[0].mxu0
      %v413 = vadd.f32 %v344, %v412
      %v414 = vpop.f32.mrb[0].mxu0
      %415 = vmatprep.mubr.f32.mxu0 0.0
      %416 = vmatmul.mubr.f32.gmra.mrb[0].mxu0 %v224
      %v417 = vpop.f32.mrb[0].mxu0
      %v418 = vadd.f32 %v344, %v417
      %v419 = vpop.f32.mrb[0].mxu0
      %420 = vdwg.mxu0
      %vm421 = vcmask 523264
      %v423 = vsel %vm421, %v315, 0
      %v426 = vsel %vm421, %v320, 0
      %v429 = vsel %vm421, %v413, 0
      %v432 = vsel %vm421, %v418, 0
      %434 = vmatprep.subr.mxu0 0.0
      %435 = vmatpush1.xpose.msra.mxu0 %v429
      %436 = vmatprep.subr.mxu0 0.0
      %437 = vmatpush1.xpose.msra.mxu0 %v432
      %438 = vmatprep.subr.mxu0 0.0
      %439 = vmatpush1.xpose.msra.mxu0 0.0
      %440 = vmatprep.subr.mxu0 0.0
      %441 = vmatpush1.xpose.msra.mxu0 0.0
      %442 = vmatprep.subr.mxu0 0.0
      %443 = vmatpush1.xpose.msra.mxu0 0.0
      %444 = vmatprep.subr.mxu0 0.0
      %445 = vmatpush1.xpose.msra.mxu0 0.0
      %446 = vmatprep.subr.mxu0 0.0
      %447 = vmatpush1.xpose.msra.mxu0 0.0
      %448 = vmatprep.subr.mxu0 0.0
      %449 = vmatpush1.xpose.msra.mxu0 0.0
      %450 = vmatprep.subr.mxu0 0.0
      %451 = vmatpush1.xpose.msra.mxu0 0.0
      %452 = vmatprep.subr.mxu0 0.0
      %453 = vmatpush1.xpose.msra.mxu0 0.0
      %454 = vmatprep.subr.mxu0 0.0
      %455 = vmatpush1.xpose.msra.mxu0 0.0
      %456 = vmatprep.subr.mxu0 0.0
      %457 = vmatpush1.xpose.msra.mxu0 0.0
      %458 = vmatprep.subr.mxu0 0.0
      %459 = vmatpush1.xpose.msra.mxu0 0.0
      %460 = vmatprep.subr.mxu0 0.0
      %461 = vmatpush1.xpose.msra.mxu0 0.0
      %462 = vmatprep.subr.mxu0 0.0
      %463 = vmatpush1.xpose.msra.mxu0 0.0
      %464 = vmatprep.subr.mxu0 0.0
      %465 = vmatpush1.xpose.msra.mxu0 0.0
      %466 = vmatprep.subr.mxu0 0.0
      %467 = vmatpush1.xpose.msra.mxu0 0.0
      %468 = vmatprep.subr.mxu0 0.0
      %469 = vmatpush1.xpose.msra.mxu0 0.0
      %470 = vmatprep.subr.mxu0 0.0
      %471 = vmatpush1.xpose.msra.mxu0 0.0
      %472 = vmatprep.subr.mxu0 0.0
      %473 = vmatpush1.xpose.msra.mxu0 0.0
      %474 = vmatprep.subr.mxu0 0.0
      %475 = vmatpush1.xpose.msra.mxu0 0.0
      %476 = vmatprep.subr.mxu0 0.0
      %477 = vmatpush1.xpose.msra.mxu0 0.0
      %478 = vmatprep.subr.mxu0 0.0
      %479 = vmatpush1.xpose.msra.mxu0 0.0
      %480 = vmatprep.subr.mxu0 0.0
      %481 = vmatpush1.xpose.msra.mxu0 0.0
      %482 = vmatprep.subr.mxu0 0.0
      %483 = vmatpush1.xpose.msra.mxu0 0.0
      %484 = vmatprep.subr.mxu0 0.0
      %485 = vmatpush1.xpose.msra.mxu0 0.0
      %486 = vmatprep.subr.mxu0 0.0
      %487 = vmatpush1.xpose.msra.mxu0 0.0
      %488 = vmatprep.subr.mxu0 0.0
      %489 = vmatpush1.xpose.msra.mxu0 0.0
      %490 = vmatprep.subr.mxu0 0.0
      %491 = vmatpush1.xpose.msra.mxu0 0.0
      %492 = vmatprep.subr.mxu0 0.0
      %493 = vmatpush1.xpose.msra.mxu0 0.0
      %494 = vmatprep.subr.mxu0 0.0
      %495 = vmatpush1.xpose.msra.mxu0 0.0
      %496 = vmatprep.subr.mxu0 0.0
      %497 = vmatpush1.xpose.msra.mxu0 0.0
      %498 = vmatprep.mubr.f32.mxu0 0.0
      %499 = vmatmul.mubr.f32.gmra.mrb[0].mxu0 %v423
      %v500 = vpop.f32.mrb[0].mxu0
      %v501 = vadd.f32 0.0, %v500
      %v502 = vpop.f32.mrb[0].mxu0
      %503 = vmatprep.mubr.f32.mxu0 0.0
      %504 = vmatmul.mubr.f32.gmra.mrb[0].mxu0 %v426
      %v505 = vpop.f32.mrb[0].mxu0
      %v506 = vadd.f32 0.0, %v505
      %v507 = vpop.f32.mrb[0].mxu0
      %508 = vdwg.mxu0
      %vm509 = vcmask 130048
      %v510 = vsel %vm509, %v501, -inf
      %511 = vmax.xlane.f32.xlu0 %v510
      %v512 = vpop.xlane.xlu0 %511
      %v513 = vsel %vm509, %v506, -inf
      %514 = vmax.xlane.f32.xlu0 %v513
      %v515 = vpop.xlane.xlu0 %514
      %v516 = vsub.f32 %v501, %v512
      %v517 = vsub.f32 %v506, %v515
      %v518 = vmul.f32 %v516, 1.442695
      %v519 = vpow.pop %v518
      %v520 = vmul.f32 %v517, 1.442695
      %v521 = vpow.pop %v520
      %v522 = vsel %vm509, %v519, 0.0
      %523 = vadd.xlane.f32.xlu0 %v522
      %v524 = vpop.xlane.xlu0 %523
      %v525 = vsel %vm509, %v521, 0.0
      %526 = vadd.xlane.f32.xlu0 %v525
      %v527 = vpop.xlane.xlu0 %526
      %v528 = vrcp.pop %v524
      %v529 = vmul.f32 0.0625, %v528
      %v530 = vrcp.pop %v527
      %v531 = vmul.f32 0.0625, %v530
      %v534 = vlaneseq
      %v535 = vand.u32 %v534, 127
      %v536 = vlaneseq
      %v537 = vshrl.u32 %v536, 7
      %v538 = vsub.s32 %v535, %v537
      %v539 = vrot.slane %v529, %v538
      %v540 = vadd.s32 %v535, 4294967288
      %v541 = vlaneseq
      %v542 = vshrl.u32 %v541, 7
      %v543 = vsub.s32 %v540, %v542
      %v544 = vrot.slane %v531, %v543
      %vm545 = vcmask 130112
      %v546 = vsel %vm545, %v544, %v539
      %v547 = vsel %vm509, %v546, 0
      %549 = vmatprep.subr.mxu0 0.0
      %550 = vmatpush1.msra.mxu0 %v519
      %551 = vmatprep.subr.mxu0 0.0
      %552 = vmatpush1.msra.mxu0 %v521
      %553 = vmatprep.subr.mxu0 0.0
      %554 = vmatpush1.msra.mxu0 0.0
      %555 = vmatprep.subr.mxu0 0.0
      %556 = vmatpush1.msra.mxu0 0.0
      %557 = vmatprep.subr.mxu0 0.0
      %558 = vmatpush1.msra.mxu0 0.0
      %559 = vmatprep.subr.mxu0 0.0
      %560 = vmatpush1.msra.mxu0 0.0
      %561 = vmatprep.subr.mxu0 0.0
      %562 = vmatpush1.msra.mxu0 0.0
      %563 = vmatprep.subr.mxu0 0.0
      %564 = vmatpush1.msra.mxu0 0.0
      %565 = vmatprep.subr.mxu0 0.0
      %566 = vmatpush1.msra.mxu0 0.0
      %567 = vmatprep.subr.mxu0 0.0
      %568 = vmatpush1.msra.mxu0 0.0
      %569 = vmatprep.subr.mxu0 0.0
      %570 = vmatpush1.msra.mxu0 0.0
      %571 = vmatprep.subr.mxu0 0.0
      %572 = vmatpush1.msra.mxu0 0.0
      %573 = vmatprep.subr.mxu0 0.0
      %574 = vmatpush1.msra.mxu0 0.0
      %575 = vmatprep.subr.mxu0 0.0
      %576 = vmatpush1.msra.mxu0 0.0
      %577 = vmatprep.subr.mxu0 0.0
      %578 = vmatpush1.msra.mxu0 0.0
      %579 = vmatprep.subr.mxu0 0.0
      %580 = vmatpush1.msra.mxu0 0.0
      %581 = vmatprep.subr.mxu0 0.0
      %582 = vmatpush1.msra.mxu0 0.0
      %583 = vmatprep.subr.mxu0 0.0
      %584 = vmatpush1.msra.mxu0 0.0
      %585 = vmatprep.subr.mxu0 0.0
      %586 = vmatpush1.msra.mxu0 0.0
      %587 = vmatprep.subr.mxu0 0.0
      %588 = vmatpush1.msra.mxu0 0.0
      %589 = vmatprep.subr.mxu0 0.0
      %590 = vmatpush1.msra.mxu0 0.0
      %591 = vmatprep.subr.mxu0 0.0
      %592 = vmatpush1.msra.mxu0 0.0
      %593 = vmatprep.subr.mxu0 0.0
      %594 = vmatpush1.msra.mxu0 0.0
      %595 = vmatprep.subr.mxu0 0.0
      %596 = vmatpush1.msra.mxu0 0.0
      %597 = vmatprep.subr.mxu0 0.0
      %598 = vmatpush1.msra.mxu0 0.0
      %599 = vmatprep.subr.mxu0 0.0
      %600 = vmatpush1.msra.mxu0 0.0
      %601 = vmatprep.subr.mxu0 0.0
      %602 = vmatpush1.msra.mxu0 0.0
      %603 = vmatprep.subr.mxu0 0.0
      %604 = vmatpush1.msra.mxu0 0.0
      %605 = vmatprep.subr.mxu0 0.0
      %606 = vmatpush1.msra.mxu0 0.0
      %607 = vmatprep.subr.mxu0 0.0
      %608 = vmatpush1.msra.mxu0 0.0
      %609 = vmatprep.subr.mxu0 0.0
      %610 = vmatpush1.msra.mxu0 0.0
      %611 = vmatprep.subr.mxu0 0.0
      %612 = vmatpush1.msra.mxu0 0.0
      %613 = vmatprep.mubr.f32.mxu0 0.0
      %614 = vmatmul.mubr.f32.gmra.mrb[0].mxu0 %v547
      %v615 = vpop.f32.mrb[0].mxu0
      %v616 = vadd.f32 0.0, %v615
      %v617 = vpop.f32.mrb[0].mxu0
      %618 = vdwg.mxu0
      %v619 = vlaneseq
      %v620 = vshrl.u32 %v619, 7
      %v621 = vsub.s32 0, %v620
      %v622 = vrot.slane %v616, %v621
      %624 = vbcast.lane.b32.xlu0 %v622, 256
      %v625 = vpop.permute.xlu0 %624
      %s627 = sor.u32 256, 8
      %628 = vbcast.lane.b32.xlu0 %v622, %s627
      %v629 = vpop.permute.xlu0 %628
      %v630 = vlaneseq
      %v631 = vshrl.u32 %v630, 7
      %v632 = vadd.s32 %v631, 8
      %vm633 = vcmp.gt.f32.partialorder %v622, %v625
      %vm634 = vcmp.gt.f32.partialorder %v622, %v629
      %vm635 = vcmp.eq.f32.partialorder %v622, %v625
      %vm636 = vcmp.eq.f32.partialorder %v622, %v629
      %vm637 = vcmp.lt.s32.totalorder %v535, %v631
      %vm638 = vcmp.lt.s32.totalorder %v535, %v632
      %vm639 = vmand %vm635, %vm637
      %vm640 = vmand %vm636, %vm638
      %vm641 = vmor %vm633, %vm639
      %vm642 = vmor %vm634, %vm640
      %v643 = vsel %vm641, 1, 0
      %v644 = vsel %vm642, 1, 0
      %v645 = vcvt.s32.f32 %v643
      %v646 = vcvt.s32.f32 %v644
      %v647 = vsel %vm509, %v645, 0.0
      %648 = vadd.xlane.f32.xlu0 %v647
      %v649 = vpop.xlane.xlu0 %648
      %v650 = vsel %vm509, %v646, 0.0
      %651 = vadd.xlane.f32.xlu0 %v650
      %v652 = vpop.xlane.xlu0 %651
      %vm653 = vcmp.lt.f32.partialorder %v649, 3.0
      %vm654 = vcmp.lt.f32.partialorder %v652, 3.0
      %v655 = vsel %vm653, 1.0, 0.0
      %v656 = vsel %vm654, 1.0, 0.0
      %vm657 = vcmp.le.s32.totalorder %v631, %v535
      %vm658 = vcmp.le.s32.totalorder %v632, %v535
      %v659 = vsel %vm657, 1, 0
      %v660 = vsel %vm658, 1, 0
      %v661 = vcvt.s32.f32 %v659
      %v662 = vcvt.s32.f32 %v660
      %v665 = vlaneseq
      %v666 = vshrl.u32 %v665, 7
      %v667 = vsub.s32 %v535, %v666
      %v668 = vrot.slane %v655, %v667
      %v669 = vlaneseq
      %v670 = vshrl.u32 %v669, 7
      %v671 = vsub.s32 %v540, %v670
      %v672 = vrot.slane %v656, %v671
      %v673 = vsel %vm545, %v672, %v668
      %v674 = vsel %vm509, %v673, 0
      %676 = vmatprep.subr.mxu0 0.0
      %677 = vmatpush1.msra.mxu0 %v661
      %678 = vmatprep.subr.mxu0 0.0
      %679 = vmatpush1.msra.mxu0 %v662
      %680 = vmatprep.subr.mxu0 0.0
      %681 = vmatpush1.msra.mxu0 0.0
      %682 = vmatprep.subr.mxu0 0.0
      %683 = vmatpush1.msra.mxu0 0.0
      %684 = vmatprep.subr.mxu0 0.0
      %685 = vmatpush1.msra.mxu0 0.0
      %686 = vmatprep.subr.mxu0 0.0
      %687 = vmatpush1.msra.mxu0 0.0
      %688 = vmatprep.subr.mxu0 0.0
      %689 = vmatpush1.msra.mxu0 0.0
      %690 = vmatprep.subr.mxu0 0.0
      %691 = vmatpush1.msra.mxu0 0.0
      %692 = vmatprep.subr.mxu0 0.0
      %693 = vmatpush1.msra.mxu0 0.0
      %694 = vmatprep.subr.mxu0 0.0
      %695 = vmatpush1.msra.mxu0 0.0
      %696 = vmatprep.subr.mxu0 0.0
      %697 = vmatpush1.msra.mxu0 0.0
      %698 = vmatprep.subr.mxu0 0.0
      %699 = vmatpush1.msra.mxu0 0.0
      %700 = vmatprep.subr.mxu0 0.0
      %701 = vmatpush1.msra.mxu0 0.0
      %702 = vmatprep.subr.mxu0 0.0
      %703 = vmatpush1.msra.mxu0 0.0
      %704 = vmatprep.subr.mxu0 0.0
      %705 = vmatpush1.msra.mxu0 0.0
      %706 = vmatprep.subr.mxu0 0.0
      %707 = vmatpush1.msra.mxu0 0.0
      %708 = vmatprep.subr.mxu0 0.0
      %709 = vmatpush1.msra.mxu0 0.0
      %710 = vmatprep.subr.mxu0 0.0
      %711 = vmatpush1.msra.mxu0 0.0
      %712 = vmatprep.subr.mxu0 0.0
      %713 = vmatpush1.msra.mxu0 0.0
      %714 = vmatprep.subr.mxu0 0.0
      %715 = vmatpush1.msra.mxu0 0.0
      %716 = vmatprep.subr.mxu0 0.0
      %717 = vmatpush1.msra.mxu0 0.0
      %718 = vmatprep.subr.mxu0 0.0
      %719 = vmatpush1.msra.mxu0 0.0
      %720 = vmatprep.subr.mxu0 0.0
      %721 = vmatpush1.msra.mxu0 0.0
      %722 = vmatprep.subr.mxu0 0.0
      %723 = vmatpush1.msra.mxu0 0.0
      %724 = vmatprep.subr.mxu0 0.0
      %725 = vmatpush1.msra.mxu0 0.0
      %726 = vmatprep.subr.mxu0 0.0
      %727 = vmatpush1.msra.mxu0 0.0
      %728 = vmatprep.subr.mxu0 0.0
      %729 = vmatpush1.msra.mxu0 0.0
      %730 = vmatprep.subr.mxu0 0.0
      %731 = vmatpush1.msra.mxu0 0.0
      %732 = vmatprep.subr.mxu0 0.0
      %733 = vmatpush1.msra.mxu0 0.0
      %734 = vmatprep.subr.mxu0 0.0
      %735 = vmatpush1.msra.mxu0 0.0
      %736 = vmatprep.subr.mxu0 0.0
      %737 = vmatpush1.msra.mxu0 0.0
      %738 = vmatprep.subr.mxu0 0.0
      %739 = vmatpush1.msra.mxu0 0.0
      %740 = vmatprep.mubr.f32.mxu0 0.0
      %741 = vmatmul.mubr.f32.gmra.mrb[0].mxu0 %v674
      %v742 = vpop.f32.mrb[0].mxu0
      %v743 = vadd.f32 0.0, %v742
      %v744 = vpop.f32.mrb[0].mxu0
      %745 = vdwg.mxu0
      %v746 = vsub.f32 %v743, 1.0
      %v747 = vcvt.s32.f32 %v631
      %v748 = vlaneseq
      %v749 = vshrl.u32 %v748, 7
      %v750 = vsub.s32 0, %v749
      %v751 = vrot.slane %v746, %v750
      %vm752 = vcmp.eq.f32.partialorder %v751, %v747
      %vm753 = vcmp.gt.f32.partialorder %v655, 0.5
      %vm754 = vcmp.gt.f32.partialorder %v656, 0.5
      %v755 = vsel %vm753, 1, 0
      %v756 = vsel %vm754, 1, 0
      %vm757 = vcmp.eq.s32.totalorder %v755, 1
      %vm758 = vcmp.eq.s32.totalorder %v756, 1
      %v759 = vsel %vm757, 1, 0
      %v760 = vsel %vm758, 1, 0
      %v761 = vlaneseq
      %v762 = vshrl.u32 %v761, 7
      %v763 = vsub.s32 %v535, %v762
      %v764 = vrot.slane %v759, %v763
      %v765 = vlaneseq
      %v766 = vshrl.u32 %v765, 7
      %v767 = vsub.s32 %v540, %v766
      %v768 = vrot.slane %v760, %v767
      %v769 = vsel %vm545, %v768, %v764
      %vm770 = vcmask 1042434
      %v771 = vsel %vm770, %v769, %v769
      %vm772 = vcmp.ne.s32.totalorder %v771, 0
      %vm773 = vmand %vm752, %vm772
      %v774 = vsel %vm773, 1.0, 0.0
      %v776 = vsel %vm509, %v774, 0
      %778 = vmatprep.subr.mxu0 0.0
      %779 = vmatpush1.msra.mxu0 %v223
      %780 = vmatprep.subr.mxu0 0.0
      %781 = vmatpush1.msra.mxu0 %v224
      %782 = vmatprep.subr.mxu0 0.0
      %783 = vmatpush1.msra.mxu0 0.0
      %784 = vmatprep.subr.mxu0 0.0
      %785 = vmatpush1.msra.mxu0 0.0
      %786 = vmatprep.subr.mxu0 0.0
      %787 = vmatpush1.msra.mxu0 0.0
      %788 = vmatprep.subr.mxu0 0.0
      %789 = vmatpush1.msra.mxu0 0.0
      %790 = vmatprep.subr.mxu0 0.0
      %791 = vmatpush1.msra.mxu0 0.0
      %792 = vmatprep.subr.mxu0 0.0
      %793 = vmatpush1.msra.mxu0 0.0
      %794 = vmatprep.subr.mxu0 0.0
      %795 = vmatpush1.msra.mxu0 0.0
      %796 = vmatprep.subr.mxu0 0.0
      %797 = vmatpush1.msra.mxu0 0.0
      %798 = vmatprep.subr.mxu0 0.0
      %799 = vmatpush1.msra.mxu0 0.0
      %800 = vmatprep.subr.mxu0 0.0
      %801 = vmatpush1.msra.mxu0 0.0
      %802 = vmatprep.subr.mxu0 0.0
      %803 = vmatpush1.msra.mxu0 0.0
      %804 = vmatprep.subr.mxu0 0.0
      %805 = vmatpush1.msra.mxu0 0.0
      %806 = vmatprep.subr.mxu0 0.0
      %807 = vmatpush1.msra.mxu0 0.0
      %808 = vmatprep.subr.mxu0 0.0
      %809 = vmatpush1.msra.mxu0 0.0
      %810 = vmatprep.subr.mxu0 0.0
      %811 = vmatpush1.msra.mxu0 0.0
      %812 = vmatprep.subr.mxu0 0.0
      %813 = vmatpush1.msra.mxu0 0.0
      %814 = vmatprep.subr.mxu0 0.0
      %815 = vmatpush1.msra.mxu0 0.0
      %816 = vmatprep.subr.mxu0 0.0
      %817 = vmatpush1.msra.mxu0 0.0
      %818 = vmatprep.subr.mxu0 0.0
      %819 = vmatpush1.msra.mxu0 0.0
      %820 = vmatprep.subr.mxu0 0.0
      %821 = vmatpush1.msra.mxu0 0.0
      %822 = vmatprep.subr.mxu0 0.0
      %823 = vmatpush1.msra.mxu0 0.0
      %824 = vmatprep.subr.mxu0 0.0
      %825 = vmatpush1.msra.mxu0 0.0
      %826 = vmatprep.subr.mxu0 0.0
      %827 = vmatpush1.msra.mxu0 0.0
      %828 = vmatprep.subr.mxu0 0.0
      %829 = vmatpush1.msra.mxu0 0.0
      %830 = vmatprep.subr.mxu0 0.0
      %831 = vmatpush1.msra.mxu0 0.0
      %832 = vmatprep.subr.mxu0 0.0
      %833 = vmatpush1.msra.mxu0 0.0
      %834 = vmatprep.subr.mxu0 0.0
      %835 = vmatpush1.msra.mxu0 0.0
      %836 = vmatprep.subr.mxu0 0.0
      %837 = vmatpush1.msra.mxu0 0.0
      %838 = vmatprep.subr.mxu0 0.0
      %839 = vmatpush1.msra.mxu0 0.0
      %840 = vmatprep.subr.mxu0 0.0
      %841 = vmatpush1.msra.mxu0 0.0
      %842 = vmatprep.mubr.f32.mxu0 0.0
      %843 = vmatmul.mubr.f32.gmra.mrb[0].mxu0 %v776
      %v844 = vpop.f32.mrb[0].mxu0
      %v845 = vadd.f32 0.0, %v844
      %v846 = vpop.f32.mrb[0].mxu0
      %847 = vdwg.mxu0
      %848 = vst [vmem:[%s222] sm:$0x7] %v845
      %p849 = scmp.lt.s32.totalorder %s16, 1
      %s850 = scalar_select %p849, %s16, 1
      %s851 = smul.addr %s850, 4
      %s852 = scalar_lea.vmem %s5, %s851
      // Predicated region
      $region41: #{tpu_custom_call.1} parent=39 // pred_check
        %p853 = pneg %p144
      $region42: #{tpu_custom_call.1} parent=39 // pred_check_branch
        %855 = sbr.rel (%p853) target = $region44
      $region43: #{tpu_custom_call.1} parent=39 // pred_region
        _
      $region44: #{tpu_custom_call.1} parent=39 // pred_fallthru
        _
    $region40: #{tpu_custom_call.1} parent=5 // pred_fallthru
      _
    %p856 = scmp.le.s32.totalorder 2, %s11
    // Predicated region
    $region45: #{tpu_custom_call.1} parent=5 // pred_check
      %p857 = pneg %p856
    $region46: #{tpu_custom_call.1} parent=5 // pred_check_branch
      %859 = sbr.rel (%p857) target = $region48
    $region47: #{tpu_custom_call.1} parent=5 // pred_region
      %s860 = ssub.s32 %s11, 2
      // Predicated region
      $region49: #{tpu_custom_call.1} parent=47 // pred_check
        %p861 = pneg %p150
      $region50: #{tpu_custom_call.1} parent=47 // pred_check_branch
        %863 = sbr.rel (%p861) target = $region52
      $region51: #{tpu_custom_call.1} parent=47 // pred_region
        %p864 = scmp.lt.s32.totalorder %s17, 1
        %s865 = scalar_select %p864, %s17, 1
        %s866 = smul.addr %s865, 4
        %s867 = scalar_lea.vmem %s5, %s866
      $region52: #{tpu_custom_call.1} parent=47 // pred_fallthru
        _
    $region48: #{tpu_custom_call.1} parent=5 // pred_fallthru
      _
  $region6: #{tpu_custom_call.1} parent=0 // loop_footer
    %s15 = sadd.s32 1, %s11
  $region7: #{tpu_custom_call.1} parent=0 // loop_footer_branch
    %10 = sbr.rel target = $region3
  $region8: #{tpu_custom_call.1} parent=0 // loop_exit
    _

</llo_original>
